<compile_context>
chip_gen: v7x
topology: tpu7x:2x2x1
jax: 0.10.0
libtpu: 0.0.40
codegen_flags: <defaults>
</compile_context>

<pallas_src>
import math

import jax
import jax.numpy as jnp
from jax.experimental import pallas as pl
from jax.experimental.pallas import tpu as pltpu


def _resolve_out_shape(x, shape):
    """Resolve the target (B, *shape), supporting a single -1 like torch.view."""
    b = x.shape[0]
    rest = math.prod(x.shape[1:]) if x.ndim > 1 else 1
    shape = tuple(int(s) for s in shape)
    if shape.count(-1) == 1:
        known = math.prod(s for s in shape if s != -1)
        shape = tuple(rest // known if s == -1 else s for s in shape)
    assert math.prod(shape) == rest, (
        f"cannot view {x.shape} as batch-preserving {shape}")
    return (b, *shape)


def _hbm_memcpy_kernel(src_hbm, dst_hbm, sem):
    # Whole-array HBM -> HBM DMA: no VMEM round-trip, no vector load/store
    # slot usage.  The DMA engine is the only resource used.
    cp = pltpu.make_async_copy(src_hbm, dst_hbm, sem)
    cp.start()
    cp.wait()


def _materialized_copy(x_view, out_shape):
    """One direct HBM->HBM DMA producing a fresh buffer with `out_shape`."""
    return pl.pallas_call(
        _hbm_memcpy_kernel,
        out_shape=jax.ShapeDtypeStruct(out_shape, x_view.dtype),
        in_specs=[pl.BlockSpec(memory_space=pl.ANY)],
        out_specs=pl.BlockSpec(memory_space=pl.ANY),
        scratch_shapes=[pltpu.SemaphoreType.DMA(())],
    )(x_view)


def pallas_reshape(x, shape, *, materialize=False):
    """Equivalent of torch Reshape(shape).forward(x) = x.view(x.size(0), *shape).

    Default path is metadata-only (zero HBM traffic).  Set materialize=True
    only if a physically fresh buffer is required; that path uses a single
    HBM->HBM DMA Pallas kernel.
    """
    out_shape = _resolve_out_shape(x, shape)

    # Fast path (per performance review): a contiguous row-major reshape is a
    # zero-cost metadata op in XLA.  Always take it.
    if not materialize:
        return jnp.reshape(x, out_shape)

    # Materialized copy path: metadata-only view to the target shape, then one
    # DMA-engine-bound HBM->HBM copy into a fresh output buffer.
    x_view = jnp.reshape(x, out_shape)
    return _materialized_copy(x_view, out_shape)


if __name__ == "__main__":
    key = jax.random.PRNGKey(0)
    # NCHW input as a conv stage would produce: batch=2, channels=4, 16x16.
    x = jax.random.normal(key, (2, 4, 16, 16), dtype=jnp.float32)

    # Target shape for the Reshape layer (4*16*16 == 16*64).
    target_shape = [16, 64]

    # Reference: pure-JAX view semantics (row-major reshape keeping batch dim).
    ref = jnp.reshape(x, (x.shape[0], *target_shape))

    # 1) Default fast path (metadata-only, what the module should use).
    out_fast = jax.block_until_ready(pallas_reshape(x, target_shape))
    assert out_fast.shape == (2, 16, 64), out_fast.shape
    assert out_fast.dtype == x.dtype
    assert jnp.array_equal(out_fast, ref), "fast-path reshape mismatch"

    # 2) Materialized path (exercises the Pallas HBM->HBM DMA kernel once).
    out_copy = jax.block_until_ready(
        pallas_reshape(x, target_shape, materialize=True))
    assert out_copy.shape == (2, 16, 64), out_copy.shape
    assert out_copy.dtype == x.dtype
    assert jnp.array_equal(out_copy, ref), "Pallas DMA-copy reshape mismatch"

    print("KERNEL_OK")
</pallas_src>

<mosaic_0001>
module attributes {stable_mosaic.version = 11 : i64} {
  func.func @_hbm_memcpy_kernel(%arg0: memref<2x16x64xf32, #tpu.memory_space<any>>, %arg1: memref<2x16x64xf32, #tpu.memory_space<any>>, %arg2: memref<!tpu.dma_semaphore, #tpu.memory_space<semaphore_mem>>) attributes {dimension_semantics = [], scalar_prefetch = 0 : i64, scratch_operands = 1 : i64, tpu.core_type = #tpu.core_type<tc>} {
    tpu.enqueue_dma source(%arg0 : memref<2x16x64xf32, #tpu.memory_space<any>>) target(%arg1 : memref<2x16x64xf32, #tpu.memory_space<any>>) target_semaphore(%arg2 : memref<!tpu.dma_semaphore, #tpu.memory_space<semaphore_mem>>)
    tpu.wait_dma2 semaphore(%arg2 : memref<!tpu.dma_semaphore, #tpu.memory_space<semaphore_mem>>) src(%arg0 : memref<2x16x64xf32, #tpu.memory_space<any>>) dst(%arg1 : memref<2x16x64xf32, #tpu.memory_space<any>>)
    return
  }
}

</mosaic_0001>

<llo_original>
// kernel: tpu_custom_call.1
$region0: #{tpu_custom_call.1}
  #allocation0 [shape = 'u32[]', space=smem, size = 0x4, offset = 0x4, fixed_abs, tag = 'smem constant byte address 0x4 - core index']
  #allocation1 [shape = 'u32[144,128]{1,0:T(1,128)}', space=vmem, size = 0x12000, scoped, tag = 'internal scratch']
  #allocation2 [shape = 's32[1]{0}', space=sflag, size = 0x4, scoped, tag = 'scratch operand']
  #allocation3 [shape = 's32[]', space=sflag, size = 0x4, offset = 0, fixed_abs, tag = 'sflag constant byte address 0x0 - dummy sync flag']
  #allocation4 [shape = 'u32[0]{0}', space=smem, size = 0, offset = 0, fixed_abs, tag = 'smem constant byte address 0x0 - null']
  %s0 = inlined_call_operand.hbm [shape: f32[2,16,64], index: 0, kind: input, shape index: {}]
  %s1 = inlined_call_operand.hbm [shape: f32[2,16,64], index: 1, kind: output, shape index: {}]
  %s2 = sld [smem:[#allocation0]]
  $region2: #{tpu_custom_call.1} parent=0
    _
  %s4 = ssub.s32 1, %s2
  %s5 = scalar_select 0, %s4, %s2
  %s7 = sshll.u32 1, 14
  %s8 = sxor.u32 4294967295, %s7
  %s11 = sshll.u32 3, 24
  %s12 = sxor.u32 4294967295, %s11
  %s13 = sand.u32 0, %s12
  %s15 = sor.u32 %s13, 0
  %18 = dma.general %s0, 512, %s1, [#allocation2], [#allocation3], [#allocation4], %s15, 0
  %s19 = smul.u32 2, 16
  %s20 = smul.u32 %s19, 1
  %s21 = sshll.u32 %s20, 4
  %22 = dma.done [#allocation2], %s21
  %23 = vsyncmov [#allocation2]
  %s24 = vpop.sfrf %23
  %p25 = scmp.eq.s32.totalorder %s24, 0
  %p26 = pneg %p25
  %28 = shalt.err (%p26)

</llo_original>
